<compile_context>
chip_gen: v6e
topology: v6e:2x2x1
jax: 0.10.0
libtpu: 0.0.40
codegen_flags: <defaults>
</compile_context>

<pallas_src>
import jax
import jax.numpy as jnp
from jax.experimental import pallas as pl
from jax.experimental.pallas import tpu as pltpu


def _round_up(n, m):
    return ((n + m - 1) // m) * m


def mlp_kernel(x_ref, w1_ref, b1_ref, w2_ref, b2_ref, w3_ref, b3_ref, o_ref):
    # Layer 1: Linear(input_dim, hidden_dim) + ReLU.
    # x is read from HBM in its native dtype; any low-precision cast happens
    # here on the VPU so the wrapper never adds an extra HBM round trip.
    x = x_ref[...].astype(w1_ref.dtype)
    h1 = jnp.dot(x, w1_ref[...], preferred_element_type=jnp.float32)
    h1 = jnp.maximum(h1 + b1_ref[...], 0.0)

    # Layer 2: Linear(hidden_dim, hidden_dim // 2) + ReLU
    h2 = jnp.dot(h1.astype(w2_ref.dtype), w2_ref[...],
                 preferred_element_type=jnp.float32)
    h2 = jnp.maximum(h2 + b2_ref[...], 0.0)

    # Layer 3: Linear(hidden_dim // 2, output_dim) -- no output padding; the
    # store is a masked vst but the HBM writeback is only out_dim columns.
    out = jnp.dot(h2.astype(w3_ref.dtype), w3_ref[...],
                  preferred_element_type=jnp.float32)
    o_ref[...] = (out + b3_ref[...]).astype(o_ref.dtype)


def property_predictor(x, params, *, param_dtype=None, out_dtype=jnp.float32,
                       block_m=1024):
    """Fused MLP forward. x: (B, input_dim).  Returns (B, output_dim) out_dtype.

    param_dtype: optional compute dtype for the weights (e.g. jnp.bfloat16).
      Biases stay f32 and are added after the f32 MXU accumulation; x stays in
      its native dtype in HBM and is cast inside the kernel.
    """
    w1, b1, w2, b2, w3, b3 = params
    B, in_dim = x.shape
    hid = w1.shape[1]
    h2_dim = w2.shape[1]
    out_dim = w3.shape[1]

    # Optional low-precision weights (bf16 fast MXU path on v6e/v7x).
    if param_dtype is not None:
        w1, w2, w3 = (w.astype(param_dtype) for w in (w1, w2, w3))

    # ---- batch tiling ------------------------------------------------------
    # Minimal padding for ragged batches: split B as evenly as possible into
    # cdiv(B, block_m) tiles, rounded up to the 8-row sublane granule.
    num_tiles = pl.cdiv(B, block_m)
    # Keep >=2 grid steps when the batch allows it so the "parallel" batch
    # axis can shard across both TensorCores on v7x (negligible cost on
    # single-TC v5e/v6e: one extra ~0.35us grid step).
    if num_tiles < 2 and B >= 16:
        num_tiles = 2
    bm = _round_up(pl.cdiv(B, num_tiles), 8)
    B_pad = bm * num_tiles
    if B_pad != B:
        x = jnp.pad(x, ((0, B_pad - B), (0, 0)))
    grid = (num_tiles,)

    def full(a):
        # Fully-resident operand: constant index_map, block = whole array.
        return pl.BlockSpec(a.shape, lambda i: (0,) * a.ndim)

    flops = 2 * B_pad * (in_dim * hid + hid * h2_dim + h2_dim * out_dim)
    bytes_accessed = (
        B_pad * in_dim * x.dtype.itemsize
        + sum(a.size * a.dtype.itemsize for a in (w1, b1, w2, b2, w3, b3))
        + B_pad * out_dim * jnp.dtype(out_dtype).itemsize
    )

    out = pl.pallas_call(
        mlp_kernel,
        out_shape=jax.ShapeDtypeStruct((B_pad, out_dim), out_dtype),
        grid=grid,
        in_specs=[
            pl.BlockSpec((bm, in_dim), lambda i: (i, 0)),  # batch-tiled x
            full(w1), full(b1), full(w2), full(b2), full(w3), full(b3),
        ],
        out_specs=pl.BlockSpec((bm, out_dim), lambda i: (i, 0)),
        compiler_params=pltpu.CompilerParams(
            dimension_semantics=("parallel",)),
        cost_estimate=pl.CostEstimate(
            flops=flops, transcendentals=0, bytes_accessed=bytes_accessed),
    )(x, w1, b1, w2, b2, w3, b3)

    return out[:B]


def init_params(key, input_dim, hidden_dim, output_dim):
    """Deterministic init matching nn.Linear shapes (transposed to (in, out))."""
    k = jax.random.split(key, 6)
    h2 = hidden_dim // 2

    def lin(kw, kb, fan_in, fan_out):
        bound = 1.0 / jnp.sqrt(fan_in)
        w = jax.random.uniform(kw, (fan_in, fan_out), jnp.float32, -bound, bound)
        b = jax.random.uniform(kb, (1, fan_out), jnp.float32, -bound, bound)
        return w, b

    w1, b1 = lin(k[0], k[1], input_dim, hidden_dim)
    w2, b2 = lin(k[2], k[3], hidden_dim, h2)
    w3, b3 = lin(k[4], k[5], h2, output_dim)
    return (w1, b1, w2, b2, w3, b3)


def reference(x, params):
    w1, b1, w2, b2, w3, b3 = params
    h1 = jnp.maximum(x @ w1 + b1, 0.0)
    h2 = jnp.maximum(h1 @ w2 + b2, 0.0)
    return h2 @ w3 + b3


if __name__ == "__main__":
    key = jax.random.PRNGKey(0)
    kx, kp, kx2 = jax.random.split(key, 3)

    batch, input_dim, hidden_dim, output_dim = 8, 32, 32, 4
    params = init_params(kp, input_dim, hidden_dim, output_dim)

    # --- small batch, f32 (single grid step) --------------------------------
    x = jax.random.normal(kx, (batch, input_dim), dtype=jnp.float32)
    out = jax.block_until_ready(property_predictor(x, params))
    ref = reference(x, params)
    assert out.shape == (batch, output_dim)
    assert out.dtype == jnp.float32
    assert jnp.allclose(out, ref, atol=1e-5, rtol=1e-5)

    # --- ragged batch, f32: 300 rows -> 2 tiles of 152 rows (4 pad rows) ----
    big_batch = 300
    xb = jax.random.normal(kx2, (big_batch, input_dim), dtype=jnp.float32)
    out_b = jax.block_until_ready(property_predictor(xb, params))
    ref_b = reference(xb, params)
    assert out_b.shape == (big_batch, output_dim)
    assert jnp.allclose(out_b, ref_b, atol=1e-5, rtol=1e-5)

    # --- bf16 weight path (x stays f32 in HBM, cast inside kernel; f32 acc).
    # Loose tolerance reflects weight quantization to bf16, not accumulation.
    out_bf16 = jax.block_until_ready(
        property_predictor(x, params, param_dtype=jnp.bfloat16))
    assert out_bf16.shape == (batch, output_dim)
    assert jnp.allclose(out_bf16, ref, atol=7.5e-2, rtol=7.5e-2)

    print("KERNEL_OK")
</pallas_src>

<mosaic_0001>
module attributes {stable_mosaic.version = 11 : i64} {
  func.func @mlp_kernel(%arg0: i32, %arg1: memref<8x32xf32, #tpu.memory_space<vmem>>, %arg2: memref<32x32xf32, #tpu.memory_space<vmem>>, %arg3: memref<1x32xf32, #tpu.memory_space<vmem>>, %arg4: memref<32x16xf32, #tpu.memory_space<vmem>>, %arg5: memref<1x16xf32, #tpu.memory_space<vmem>>, %arg6: memref<16x4xf32, #tpu.memory_space<vmem>>, %arg7: memref<1x4xf32, #tpu.memory_space<vmem>>, %arg8: memref<8x4xf32, #tpu.memory_space<vmem>>) attributes {dimension_semantics = [#tpu.dimension_semantics<parallel>], iteration_bounds = array<i64: 1>, scalar_prefetch = 0 : i64, scratch_operands = 0 : i64, tpu.core_type = #tpu.core_type<tc>, window_params = [{transform_indices = @transform_0, window_bounds = array<i64: 8, 32>}, {pipeline_mode = #tpu.pipeline_mode<synchronous>, transform_indices = @transform_1, window_bounds = array<i64: 32, 32>}, {pipeline_mode = #tpu.pipeline_mode<synchronous>, transform_indices = @transform_2, window_bounds = array<i64: 1, 32>}, {pipeline_mode = #tpu.pipeline_mode<synchronous>, transform_indices = @transform_3, window_bounds = array<i64: 32, 16>}, {pipeline_mode = #tpu.pipeline_mode<synchronous>, transform_indices = @transform_4, window_bounds = array<i64: 1, 16>}, {pipeline_mode = #tpu.pipeline_mode<synchronous>, transform_indices = @transform_5, window_bounds = array<i64: 16, 4>}, {pipeline_mode = #tpu.pipeline_mode<synchronous>, transform_indices = @transform_6, window_bounds = array<i64: 1, 4>}, {transform_indices = @transform_7, window_bounds = array<i64: 8, 4>}]} {
    %c0 = arith.constant 0 : index
    %c0_0 = arith.constant 0 : index
    %0 = vector.load %arg1[%c0, %c0_0] : memref<8x32xf32, #tpu.memory_space<vmem>>, vector<8x32xf32>
    %c0_1 = arith.constant 0 : index
    %c0_2 = arith.constant 0 : index
    %1 = vector.load %arg2[%c0_1, %c0_2] : memref<32x32xf32, #tpu.memory_space<vmem>>, vector<32x32xf32>
    %cst = arith.constant dense<0.000000e+00> : vector<8x32xf32>
    %2 = tpu.matmul %0, %1, %cst {dimension_numbers = #tpu.dot_dimension_numbers<[1], [0], [0], [1], [0, 0, 1, 1], [], []>} : vector<8x32xf32>, vector<32x32xf32>, vector<8x32xf32> -> vector<8x32xf32>
    %c0_3 = arith.constant 0 : index
    %c0_4 = arith.constant 0 : index
    %3 = vector.load %arg3[%c0_3, %c0_4] : memref<1x32xf32, #tpu.memory_space<vmem>>, vector<1x32xf32>
    %4 = vector.broadcast %3 : vector<1x32xf32> to vector<8x32xf32>
    %5 = arith.addf %2, %4 : vector<8x32xf32>
    %cst_5 = arith.constant 0.000000e+00 : f32
    %6 = vector.broadcast %cst_5 : f32 to vector<8x32xf32>
    %7 = arith.maximumf %5, %6 : vector<8x32xf32>
    %c0_6 = arith.constant 0 : index
    %c0_7 = arith.constant 0 : index
    %8 = vector.load %arg4[%c0_6, %c0_7] : memref<32x16xf32, #tpu.memory_space<vmem>>, vector<32x16xf32>
    %cst_8 = arith.constant dense<0.000000e+00> : vector<8x16xf32>
    %9 = tpu.matmul %7, %8, %cst_8 {dimension_numbers = #tpu.dot_dimension_numbers<[1], [0], [0], [1], [0, 0, 1, 1], [], []>} : vector<8x32xf32>, vector<32x16xf32>, vector<8x16xf32> -> vector<8x16xf32>
    %c0_9 = arith.constant 0 : index
    %c0_10 = arith.constant 0 : index
    %10 = vector.load %arg5[%c0_9, %c0_10] : memref<1x16xf32, #tpu.memory_space<vmem>>, vector<1x16xf32>
    %11 = vector.broadcast %10 : vector<1x16xf32> to vector<8x16xf32>
    %12 = arith.addf %9, %11 : vector<8x16xf32>
    %cst_11 = arith.constant 0.000000e+00 : f32
    %13 = vector.broadcast %cst_11 : f32 to vector<8x16xf32>
    %14 = arith.maximumf %12, %13 : vector<8x16xf32>
    %c0_12 = arith.constant 0 : index
    %c0_13 = arith.constant 0 : index
    %15 = vector.load %arg6[%c0_12, %c0_13] : memref<16x4xf32, #tpu.memory_space<vmem>>, vector<16x4xf32>
    %cst_14 = arith.constant dense<0.000000e+00> : vector<8x4xf32>
    %16 = tpu.matmul %14, %15, %cst_14 {dimension_numbers = #tpu.dot_dimension_numbers<[1], [0], [0], [1], [0, 0, 1, 1], [], []>} : vector<8x16xf32>, vector<16x4xf32>, vector<8x4xf32> -> vector<8x4xf32>
    %c0_15 = arith.constant 0 : index
    %c0_16 = arith.constant 0 : index
    %17 = vector.load %arg7[%c0_15, %c0_16] : memref<1x4xf32, #tpu.memory_space<vmem>>, vector<1x4xf32>
    %18 = vector.broadcast %17 : vector<1x4xf32> to vector<8x4xf32>
    %19 = arith.addf %16, %18 : vector<8x4xf32>
    %c0_17 = arith.constant 0 : index
    %c0_18 = arith.constant 0 : index
    %20 = vector.load %arg8[%c0_17, %c0_18] : memref<8x4xf32, #tpu.memory_space<vmem>>, vector<8x4xf32>
    tpu.vector_store %arg8[%c0_17, %c0_18], %19 {strides = array<i32>} : memref<8x4xf32, #tpu.memory_space<vmem>>, vector<8x4xf32>,
    return
  }
  func.func @transform_0(%arg0: i32) -> (i32, i32) {
    %c0_i32 = arith.constant 0 : i32
    %c0_i32_0 = arith.constant 0 : i32
    return %arg0, %c0_i32 : i32, i32
  }
  func.func @transform_1(%arg0: i32) -> (i32, i32) {
    %c0_i32 = arith.constant 0 : i32
    %c0_i32_0 = arith.constant 0 : i32
    %c0_i32_1 = arith.constant 0 : i32
    return %c0_i32, %c0_i32_0 : i32, i32
  }
  func.func @transform_2(%arg0: i32) -> (i32, i32) {
    %c0_i32 = arith.constant 0 : i32
    %c0_i32_0 = arith.constant 0 : i32
    %c0_i32_1 = arith.constant 0 : i32
    return %c0_i32, %c0_i32_0 : i32, i32
  }
  func.func @transform_3(%arg0: i32) -> (i32, i32) {
    %c0_i32 = arith.constant 0 : i32
    %c0_i32_0 = arith.constant 0 : i32
    %c0_i32_1 = arith.constant 0 : i32
    return %c0_i32, %c0_i32_0 : i32, i32
  }
  func.func @transform_4(%arg0: i32) -> (i32, i32) {
    %c0_i32 = arith.constant 0 : i32
    %c0_i32_0 = arith.constant 0 : i32
    %c0_i32_1 = arith.constant 0 : i32
    return %c0_i32, %c0_i32_0 : i32, i32
  }
  func.func @transform_5(%arg0: i32) -> (i32, i32) {
    %c0_i32 = arith.constant 0 : i32
    %c0_i32_0 = arith.constant 0 : i32
    %c0_i32_1 = arith.constant 0 : i32
    return %c0_i32, %c0_i32_0 : i32, i32
  }
  func.func @transform_6(%arg0: i32) -> (i32, i32) {
    %c0_i32 = arith.constant 0 : i32
    %c0_i32_0 = arith.constant 0 : i32
    %c0_i32_1 = arith.constant 0 : i32
    return %c0_i32, %c0_i32_0 : i32, i32
  }
  func.func @transform_7(%arg0: i32) -> (i32, i32) {
    %c0_i32 = arith.constant 0 : i32
    %c0_i32_0 = arith.constant 0 : i32
    return %arg0, %c0_i32 : i32, i32
  }
}

</mosaic_0001>

<llo_original>
// kernel: tpu_custom_call.1
$region0: #{tpu_custom_call.1}
  #allocation0 [shape = 'u32[]', space=smem, size = 0x4, offset = 0x4, fixed_abs, tag = 'smem constant byte address 0x4 - core index']
  #allocation1 [shape = 'u32[144,128]{1,0:T(1,128)}', space=vmem, size = 0x12000, scoped, tag = 'internal scratch']
  %s0 = inlined_call_operand.vmem [shape: f32[8,32], index: 0, kind: input, shape index: {}]
  %s1 = inlined_call_operand.vmem [shape: f32[32,32], index: 1, kind: input, shape index: {}]
  %s2 = inlined_call_operand.vmem [shape: f32[1,32], index: 2, kind: input, shape index: {}]
  %s3 = inlined_call_operand.vmem [shape: f32[32,16], index: 3, kind: input, shape index: {}]
  %s4 = inlined_call_operand.vmem [shape: f32[1,16], index: 4, kind: input, shape index: {}]
  %s5 = inlined_call_operand.vmem [shape: f32[16,4], index: 5, kind: input, shape index: {}]
  %s6 = inlined_call_operand.vmem [shape: f32[1,4], index: 6, kind: input, shape index: {}]
  %s7 = inlined_call_operand.vmem [shape: f32[8,4], index: 7, kind: output, shape index: {}]
  %s8 = sld [smem:[#allocation0]]
  $region38: #{tpu_custom_call.1} parent=0
    _
  %s10 = ssub.s32 1, %s8
  %s11 = scalar_select 0, %s10, %s8
  // Predicated region
  $region2: #{tpu_custom_call.1} parent=0 // pred_check
    _
  $region3: #{tpu_custom_call.1} parent=0 // pred_check_branch
    %13 = sbr.rel (0) target = $region5
  $region4: #{tpu_custom_call.1} parent=0 // pred_region
    _
  $region5: #{tpu_custom_call.1} parent=0 // pred_fallthru
    _
  // Predicated region
  $region6: #{tpu_custom_call.1} parent=0 // pred_check
    _
  $region7: #{tpu_custom_call.1} parent=0 // pred_check_branch
    %15 = sbr.rel (0) target = $region9
  $region8: #{tpu_custom_call.1} parent=0 // pred_region
    _
  $region9: #{tpu_custom_call.1} parent=0 // pred_fallthru
    _
  // Predicated region
  $region10: #{tpu_custom_call.1} parent=0 // pred_check
    _
  $region11: #{tpu_custom_call.1} parent=0 // pred_check_branch
    %17 = sbr.rel (0) target = $region13
  $region12: #{tpu_custom_call.1} parent=0 // pred_region
    _
  $region13: #{tpu_custom_call.1} parent=0 // pred_fallthru
    _
  // Predicated region
  $region14: #{tpu_custom_call.1} parent=0 // pred_check
    _
  $region15: #{tpu_custom_call.1} parent=0 // pred_check_branch
    %19 = sbr.rel (0) target = $region17
  $region16: #{tpu_custom_call.1} parent=0 // pred_region
    _
  $region17: #{tpu_custom_call.1} parent=0 // pred_fallthru
    _
  // Predicated region
  $region18: #{tpu_custom_call.1} parent=0 // pred_check
    _
  $region19: #{tpu_custom_call.1} parent=0 // pred_check_branch
    %21 = sbr.rel (0) target = $region21
  $region20: #{tpu_custom_call.1} parent=0 // pred_region
    _
  $region21: #{tpu_custom_call.1} parent=0 // pred_fallthru
    _
  // Predicated region
  $region22: #{tpu_custom_call.1} parent=0 // pred_check
    _
  $region23: #{tpu_custom_call.1} parent=0 // pred_check_branch
    %23 = sbr.rel (0) target = $region25
  $region24: #{tpu_custom_call.1} parent=0 // pred_region
    _
  $region25: #{tpu_custom_call.1} parent=0 // pred_fallthru
    _
  // Predicated region
  $region26: #{tpu_custom_call.1} parent=0 // pred_check
    _
  $region27: #{tpu_custom_call.1} parent=0 // pred_check_branch
    %25 = sbr.rel (0) target = $region29
  $region28: #{tpu_custom_call.1} parent=0 // pred_region
    _
  $region29: #{tpu_custom_call.1} parent=0 // pred_fallthru
    _
  %v26 = vld [vmem:[%s0] sm:$0xff]
  %v27 = vld [vmem:[%s1] sm:$0xff]
  %v28 = vld [vmem:[%s1 + $0x8] sm:$0xff]
  %v29 = vld [vmem:[%s1 + $0x10] sm:$0xff]
  %v30 = vld [vmem:[%s1 + $0x18] sm:$0xff]
  %v31 = vld [vmem:[%s2] sm:$0x1]
  %v33 = vlaneseq
  %v34 = vshrl.u32 %v33, 7
  %v35 = vsub.s32 0, %v34
  %v36 = vrot.slane %v31, %v35
  %vm38 = vcmask 261120
  %v40 = vsel %vm38, %v26, 0
  %42 = vmatprep.subr.mxu0 0.0
  %43 = vmatpush1.msra.mxu0 0.0
  %44 = vmatprep.subr.mxu0 0.0
  %45 = vmatpush1.msra.mxu0 0.0
  %46 = vmatprep.subr.mxu0 0.0
  %47 = vmatpush1.msra.mxu0 0.0
  %48 = vmatprep.subr.mxu0 0.0
  %49 = vmatpush1.msra.mxu0 0.0
  %50 = vmatprep.subr.mxu0 0.0
  %51 = vmatpush1.msra.mxu0 0.0
  %52 = vmatprep.subr.mxu0 0.0
  %53 = vmatpush1.msra.mxu0 0.0
  %54 = vmatprep.subr.mxu0 0.0
  %55 = vmatpush1.msra.mxu0 0.0
  %56 = vmatprep.subr.mxu0 0.0
  %57 = vmatpush1.msra.mxu0 0.0
  %58 = vmatprep.subr.mxu0 0.0
  %59 = vmatpush1.msra.mxu0 0.0
  %60 = vmatprep.subr.mxu0 0.0
  %61 = vmatpush1.msra.mxu0 0.0
  %62 = vmatprep.subr.mxu0 0.0
  %63 = vmatpush1.msra.mxu0 0.0
  %64 = vmatprep.subr.mxu0 0.0
  %65 = vmatpush1.msra.mxu0 0.0
  %66 = vmatprep.subr.mxu0 0.0
  %67 = vmatpush1.msra.mxu0 %v30
  %68 = vmatprep.subr.mxu0 0.0
  %69 = vmatpush1.msra.mxu0 %v29
  %70 = vmatprep.subr.mxu0 0.0
  %71 = vmatpush1.msra.mxu0 %v28
  %72 = vmatprep.subr.mxu0 0.0
  %73 = vmatpush1.msra.mxu0 %v27
  %74 = vmatprep.subr.mxu0 0.0
  %75 = vmatpush2.msra.mxu0 0.0
  %76 = vmatprep.subr.mxu0 0.0
  %77 = vmatpush2.msra.mxu0 0.0
  %78 = vmatprep.subr.mxu0 0.0
  %79 = vmatpush2.msra.mxu0 0.0
  %80 = vmatprep.subr.mxu0 0.0
  %81 = vmatpush2.msra.mxu0 0.0
  %82 = vmatprep.subr.mxu0 0.0
  %83 = vmatpush2.msra.mxu0 0.0
  %84 = vmatprep.subr.mxu0 0.0
  %85 = vmatpush2.msra.mxu0 0.0
  %86 = vmatprep.subr.mxu0 0.0
  %87 = vmatpush2.msra.mxu0 0.0
  %88 = vmatprep.subr.mxu0 0.0
  %89 = vmatpush2.msra.mxu0 0.0
  %90 = vmatprep.subr.mxu0 0.0
  %91 = vmatpush2.msra.mxu0 0.0
  %92 = vmatprep.subr.mxu0 0.0
  %93 = vmatpush2.msra.mxu0 0.0
  %94 = vmatprep.subr.mxu0 0.0
  %95 = vmatpush2.msra.mxu0 0.0
  %96 = vmatprep.subr.mxu0 0.0
  %97 = vmatpush2.msra.mxu0 0.0
  %98 = vmatprep.subr.mxu0 0.0
  %99 = vmatpush2.msra.mxu0 0.0
  %100 = vmatprep.subr.mxu0 0.0
  %101 = vmatpush2.msra.mxu0 0.0
  %102 = vmatprep.subr.mxu0 0.0
  %103 = vmatpush2.msra.mxu0 0.0
  %104 = vmatprep.subr.mxu0 0.0
  %105 = vmatpush2.msra.mxu0 0.0
  %106 = vmatprep.mubr.f32.mxu0 0.0
  %107 = vmatmul.mubr.f32.gmra.mxu0 %v40
  %v108 = vpop.f32.mrf.mxu0
  %v109 = vadd.f32 %v36, %v108
  %v110 = vpop.f32.mrf.mxu0
  %111 = vdwg.mxu0
  %v112 = vmax.f32 %v109, 0.0
  %v113 = vld [vmem:[%s3] sm:$0xff]
  %v114 = vld [vmem:[%s3 + $0x8] sm:$0xff]
  %v115 = vld [vmem:[%s3 + $0x10] sm:$0xff]
  %v116 = vld [vmem:[%s3 + $0x18] sm:$0xff]
  %v117 = vld [vmem:[%s4] sm:$0x1]
  %v119 = vlaneseq
  %v120 = vshrl.u32 %v119, 7
  %v121 = vsub.s32 0, %v120
  %v122 = vrot.slane %v117, %v121
  %v125 = vsel %vm38, %v112, 0
  %127 = vmatprep.subr.mxu0 0.0
  %128 = vmatpush1.msra.mxu0 0.0
  %129 = vmatprep.subr.mxu0 0.0
  %130 = vmatpush1.msra.mxu0 0.0
  %131 = vmatprep.subr.mxu0 0.0
  %132 = vmatpush1.msra.mxu0 0.0
  %133 = vmatprep.subr.mxu0 0.0
  %134 = vmatpush1.msra.mxu0 0.0
  %135 = vmatprep.subr.mxu0 0.0
  %136 = vmatpush1.msra.mxu0 0.0
  %137 = vmatprep.subr.mxu0 0.0
  %138 = vmatpush1.msra.mxu0 0.0
  %139 = vmatprep.subr.mxu0 0.0
  %140 = vmatpush1.msra.mxu0 0.0
  %141 = vmatprep.subr.mxu0 0.0
  %142 = vmatpush1.msra.mxu0 0.0
  %143 = vmatprep.subr.mxu0 0.0
  %144 = vmatpush1.msra.mxu0 0.0
  %145 = vmatprep.subr.mxu0 0.0
  %146 = vmatpush1.msra.mxu0 0.0
  %147 = vmatprep.subr.mxu0 0.0
  %148 = vmatpush1.msra.mxu0 0.0
  %149 = vmatprep.subr.mxu0 0.0
  %150 = vmatpush1.msra.mxu0 0.0
  %151 = vmatprep.subr.mxu0 0.0
  %152 = vmatpush1.msra.mxu0 %v116
  %153 = vmatprep.subr.mxu0 0.0
  %154 = vmatpush1.msra.mxu0 %v115
  %155 = vmatprep.subr.mxu0 0.0
  %156 = vmatpush1.msra.mxu0 %v114
  %157 = vmatprep.subr.mxu0 0.0
  %158 = vmatpush1.msra.mxu0 %v113
  %159 = vmatprep.subr.mxu0 0.0
  %160 = vmatpush2.msra.mxu0 0.0
  %161 = vmatprep.subr.mxu0 0.0
  %162 = vmatpush2.msra.mxu0 0.0
  %163 = vmatprep.subr.mxu0 0.0
  %164 = vmatpush2.msra.mxu0 0.0
  %165 = vmatprep.subr.mxu0 0.0
  %166 = vmatpush2.msra.mxu0 0.0
  %167 = vmatprep.subr.mxu0 0.0
  %168 = vmatpush2.msra.mxu0 0.0
  %169 = vmatprep.subr.mxu0 0.0
  %170 = vmatpush2.msra.mxu0 0.0
  %171 = vmatprep.subr.mxu0 0.0
  %172 = vmatpush2.msra.mxu0 0.0
  %173 = vmatprep.subr.mxu0 0.0
  %174 = vmatpush2.msra.mxu0 0.0
  %175 = vmatprep.subr.mxu0 0.0
  %176 = vmatpush2.msra.mxu0 0.0
  %177 = vmatprep.subr.mxu0 0.0
  %178 = vmatpush2.msra.mxu0 0.0
  %179 = vmatprep.subr.mxu0 0.0
  %180 = vmatpush2.msra.mxu0 0.0
  %181 = vmatprep.subr.mxu0 0.0
  %182 = vmatpush2.msra.mxu0 0.0
  %183 = vmatprep.subr.mxu0 0.0
  %184 = vmatpush2.msra.mxu0 0.0
  %185 = vmatprep.subr.mxu0 0.0
  %186 = vmatpush2.msra.mxu0 0.0
  %187 = vmatprep.subr.mxu0 0.0
  %188 = vmatpush2.msra.mxu0 0.0
  %189 = vmatprep.subr.mxu0 0.0
  %190 = vmatpush2.msra.mxu0 0.0
  %191 = vmatprep.mubr.f32.mxu0 0.0
  %192 = vmatmul.mubr.f32.gmra.mxu0 %v125
  %v193 = vpop.f32.mrf.mxu0
  %v194 = vadd.f32 %v122, %v193
  %v195 = vpop.f32.mrf.mxu0
  %196 = vdwg.mxu0
  %v197 = vmax.f32 %v194, 0.0
  %v198 = vld [vmem:[%s5] sm:$0xff]
  %v199 = vld [vmem:[%s5 + $0x8] sm:$0xff]
  %v200 = vld [vmem:[%s6] sm:$0x1]
  %v202 = vlaneseq
  %v203 = vshrl.u32 %v202, 7
  %v204 = vsub.s32 0, %v203
  %v205 = vrot.slane %v200, %v204
  %vm207 = vcmask 130048
  %v209 = vsel %vm207, %v197, 0
  %211 = vmatprep.subr.mxu0 0.0
  %212 = vmatpush1.msra.mxu0 0.0
  %213 = vmatprep.subr.mxu0 0.0
  %214 = vmatpush1.msra.mxu0 0.0
  %215 = vmatprep.subr.mxu0 0.0
  %216 = vmatpush1.msra.mxu0 0.0
  %217 = vmatprep.subr.mxu0 0.0
  %218 = vmatpush1.msra.mxu0 0.0
  %219 = vmatprep.subr.mxu0 0.0
  %220 = vmatpush1.msra.mxu0 0.0
  %221 = vmatprep.subr.mxu0 0.0
  %222 = vmatpush1.msra.mxu0 0.0
  %223 = vmatprep.subr.mxu0 0.0
  %224 = vmatpush1.msra.mxu0 0.0
  %225 = vmatprep.subr.mxu0 0.0
  %226 = vmatpush1.msra.mxu0 0.0
  %227 = vmatprep.subr.mxu0 0.0
  %228 = vmatpush1.msra.mxu0 0.0
  %229 = vmatprep.subr.mxu0 0.0
  %230 = vmatpush1.msra.mxu0 0.0
  %231 = vmatprep.subr.mxu0 0.0
  %232 = vmatpush1.msra.mxu0 0.0
  %233 = vmatprep.subr.mxu0 0.0
  %234 = vmatpush1.msra.mxu0 0.0
  %235 = vmatprep.subr.mxu0 0.0
  %236 = vmatpush1.msra.mxu0 0.0
  %237 = vmatprep.subr.mxu0 0.0
  %238 = vmatpush1.msra.mxu0 0.0
  %239 = vmatprep.subr.mxu0 0.0
  %240 = vmatpush1.msra.mxu0 %v199
  %241 = vmatprep.subr.mxu0 0.0
  %242 = vmatpush1.msra.mxu0 %v198
  %243 = vmatprep.subr.mxu0 0.0
  %244 = vmatpush2.msra.mxu0 0.0
  %245 = vmatprep.subr.mxu0 0.0
  %246 = vmatpush2.msra.mxu0 0.0
  %247 = vmatprep.subr.mxu0 0.0
  %248 = vmatpush2.msra.mxu0 0.0
  %249 = vmatprep.subr.mxu0 0.0
  %250 = vmatpush2.msra.mxu0 0.0
  %251 = vmatprep.subr.mxu0 0.0
  %252 = vmatpush2.msra.mxu0 0.0
  %253 = vmatprep.subr.mxu0 0.0
  %254 = vmatpush2.msra.mxu0 0.0
  %255 = vmatprep.subr.mxu0 0.0
  %256 = vmatpush2.msra.mxu0 0.0
  %257 = vmatprep.subr.mxu0 0.0
  %258 = vmatpush2.msra.mxu0 0.0
  %259 = vmatprep.subr.mxu0 0.0
  %260 = vmatpush2.msra.mxu0 0.0
  %261 = vmatprep.subr.mxu0 0.0
  %262 = vmatpush2.msra.mxu0 0.0
  %263 = vmatprep.subr.mxu0 0.0
  %264 = vmatpush2.msra.mxu0 0.0
  %265 = vmatprep.subr.mxu0 0.0
  %266 = vmatpush2.msra.mxu0 0.0
  %267 = vmatprep.subr.mxu0 0.0
  %268 = vmatpush2.msra.mxu0 0.0
  %269 = vmatprep.subr.mxu0 0.0
  %270 = vmatpush2.msra.mxu0 0.0
  %271 = vmatprep.subr.mxu0 0.0
  %272 = vmatpush2.msra.mxu0 0.0
  %273 = vmatprep.subr.mxu0 0.0
  %274 = vmatpush2.msra.mxu0 0.0
  %275 = vmatprep.mubr.f32.mxu0 0.0
  %276 = vmatmul.mubr.f32.gmra.mxu0 %v209
  %v277 = vpop.f32.mrf.mxu0
  %v278 = vadd.f32 %v205, %v277
  %v279 = vpop.f32.mrf.mxu0
  %280 = vdwg.mxu0
  %vm281 = vcmask 31744
  %282 = vst.msk [vmem:[%s7] sm:$0xff] %vm281, %v278
  // Predicated region
  $region30: #{tpu_custom_call.1} parent=0 // pred_check
    _
  $region31: #{tpu_custom_call.1} parent=0 // pred_check_branch
    %284 = sbr.rel (0) target = $region33
  $region32: #{tpu_custom_call.1} parent=0 // pred_region
    _
  $region33: #{tpu_custom_call.1} parent=0 // pred_fallthru
    _
  // Predicated region
  $region34: #{tpu_custom_call.1} parent=0 // pred_check
    _
  $region35: #{tpu_custom_call.1} parent=0 // pred_check_branch
    %286 = sbr.rel (0) target = $region37
  $region36: #{tpu_custom_call.1} parent=0 // pred_region
    _
  $region37: #{tpu_custom_call.1} parent=0 // pred_fallthru
    _

</llo_original>
